<compile_context>
chip_gen: v6e
topology: v6e:2x2x1
jax: 0.10.0
libtpu: 0.0.40
codegen_flags: <defaults>
</compile_context>

<pallas_src>
import math

import numpy as np
import jax
import jax.numpy as jnp
from jax.experimental import pallas as pl
from jax.experimental.pallas import tpu as pltpu

_HI = jax.lax.Precision.HIGHEST  # reference only


def _round_up(x, m):
    return (x + m - 1) // m * m


# ----------------------------- Pallas kernels -----------------------------

def _sts_split_kernel(shi_ref, slo_ref, sts_ref):
    """Per-way Gram S^T S with a two-term bf16 split of S (3 bf16 MXU passes)."""
    shi = shi_ref[0]                                    # (sr, d) bf16
    slo = slo_ref[0]                                    # (sr, d) bf16
    dims = (((0,), (0,)), ((), ()))                     # contract rows: A^T B
    hh = jax.lax.dot_general(shi, shi, dims, preferred_element_type=jnp.float32)
    hl = jax.lax.dot_general(shi, slo, dims, preferred_element_type=jnp.float32)
    lh = jax.lax.dot_general(slo, shi, dims, preferred_element_type=jnp.float32)
    sts_ref[0] = hh + (hl + lh)


def _sts_split_kernel_sym(shi_ref, slo_ref, sts_ref):
    """Same Gram, but Slo^T Shi == (Shi^T Slo)^T exactly: 2 MXU passes + one
    (d,d) XLU transpose.  Used only when d % 128 == 0 (canonical transpose
    shape), where kernel A's FLOPs actually matter (ResNet12 path)."""
    shi = shi_ref[0]                                    # (sr, d) bf16
    slo = slo_ref[0]                                    # (sr, d) bf16
    dims = (((0,), (0,)), ((), ()))
    hh = jax.lax.dot_general(shi, shi, dims, preferred_element_type=jnp.float32)
    hl = jax.lax.dot_general(shi, slo, dims, preferred_element_type=jnp.float32)
    sts_ref[0] = hh + hl + hl.T


def _make_dist_kernel(WB, d):
    """Kernel B: reconstruction residual + per-way squared distances.

    q_ref : (TQ, d)       bf16 query rows (positions)   -- streamed
    g_ref : (d, WB*d)     bf16 packed (rho*hat_w - I)   -- VMEM-resident
    out   : (1, WB, TQ)   f32 per-position squared distance (lane-dense in TQ)
    """
    WBd = WB * d

    def kernel(q_ref, g_ref, out_ref):
        # G already holds rho*hat - I (built in f32 glue), so diff == Q_bar - Q
        # exactly.  bf16 in -> bf16 out; the MXU still accumulates in f32.
        diff = jnp.dot(q_ref[...], g_ref[...])                    # (TQ, WB*d)
        sq = diff * diff                                          # bf16 VPU
        # 0/1 selector summing each way's d-wide lane chunk.  Generated in
        # VMEM (no HBM input / DMA / double-buffer) and kept in bf16 so the
        # reduction is a guaranteed single bf16 MXU pass (explicit precision).
        row = jax.lax.broadcasted_iota(jnp.int32, (WB, WBd), 0)
        col = jax.lax.broadcasted_iota(jnp.int32, (WB, WBd), 1)
        sel = jnp.where((col >= row * d) & (col < (row + 1) * d),
                        jnp.float32(1), jnp.float32(0)).astype(jnp.bfloat16)
        out_ref[0] = jax.lax.dot_general(                         # (WB, TQ)
            sel, sq, (((1,), (1,)), ((), ())),
            preferred_element_type=jnp.float32)

    return kernel


# ------------------------------- wrapper -----------------------------------

def frn_forward(feature_map_nchw, r, scale, *, way, shot, query_shot,
                resnet=False):
    """FRN.forward on a pre-extracted backbone feature map (NCHW)."""
    B, d, H, W = feature_map_nchw.shape
    res = H * W
    assert B == way * shot + way * query_shot
    ws = way * shot
    sr = shot * res
    query_num = way * query_shot
    qr = query_num * res

    if resnet:
        # get_feature_map's  feature_map / sqrt(640)  for the ResNet12 backbone.
        feature_map_nchw = feature_map_nchw / np.float32(np.sqrt(640.0))

    # get_feature_map's permute, done per half (support stays f32 — it is a
    # module output; query is cast to bf16 *before* the transpose so the
    # relayout pre-pass moves half the bytes).
    # TODO(synk): folding this cast+transpose into kernel B (reading the NCHW
    # block and relayouting in VMEM on the XLU) would remove one more HBM pass.
    support = jnp.transpose(
        feature_map_nchw[:ws].reshape(ws, d, res), (0, 2, 1)
    ).reshape(way, sr, d)                                           # f32
    query = jnp.transpose(
        feature_map_nchw[ws:].astype(jnp.bfloat16).reshape(query_num, d, res),
        (0, 2, 1)).reshape(qr, d)                                   # bf16

    alpha, beta = r[0], r[1]
    lam = (sr / d) * jnp.exp(alpha) + 1e-6
    rho = jnp.exp(beta)

    # --- kernel A: per-way Gram matrices (split-bf16, native MXU) ---
    s_hi = support.astype(jnp.bfloat16)
    s_lo = (support - s_hi.astype(jnp.float32)).astype(jnp.bfloat16)
    sts_kernel = _sts_split_kernel_sym if d % 128 == 0 else _sts_split_kernel
    sts = pl.pallas_call(
        sts_kernel,
        out_shape=jax.ShapeDtypeStruct((way, d, d), jnp.float32),
        grid=(way,),
        in_specs=[pl.BlockSpec((1, sr, d), lambda w: (w, 0, 0)),
                  pl.BlockSpec((1, sr, d), lambda w: (w, 0, 0))],
        out_specs=pl.BlockSpec((1, d, d), lambda w: (w, 0, 0)),
        compiler_params=pltpu.CompilerParams(
            dimension_semantics=("parallel",),
            vmem_limit_bytes=32 * 1024 * 1024),
    )(s_hi, s_lo)

    # TODO(synk): ridge solve stays in plain-JAX glue (no Pallas primitive).
    eye = jnp.eye(d, dtype=jnp.float32)
    hat = jnp.linalg.solve(sts + lam * eye[None], sts)              # (way,d,d)

    # G_w = rho*hat_w - I  so  Q @ G_w == Q_bar_w - Q exactly.
    g = rho * hat - eye[None]

    # Lane-pack WB ways so WB*d is a multiple of 256 (full MXU column
    # occupancy on v6e/v7x, 128-aligned on v5e).  Padded ways get zero G
    # (zero distance) and are sliced off afterwards — no collapse fallback.
    m = 256 // math.gcd(d, 256)                  # min #ways per aligned block
    wb_cap = max(m, ((2048 // d) // m) * m)      # ~2048-lane block budget
    WB = min(wb_cap, _round_up(way, m))
    n_wb = -(-way // WB)
    way_pad = n_wb * WB
    g = jnp.pad(g, ((0, way_pad - way), (0, 0), (0, 0)))
    g_packed = jnp.transpose(g, (1, 0, 2)).reshape(d, way_pad * d)
    g_packed = g_packed.astype(jnp.bfloat16)

    # Query-row tile: multiple of 128, capped at 1024 (v7x 64-MiB-VMEM safe,
    # 48 MiB scoped limit holds on all gens), chosen so padded-row waste is
    # <~5% and the (TQ, WB*d) bf16 diff temporary stays under ~8 MiB.
    qr_cap = max(128, _round_up(qr, 128))
    cands = [c for c in range(1024, 0, -128)
             if c <= qr_cap and c * WB * d * 2 <= 8 * 1024 * 1024] or [128]
    _padw = lambda c: _round_up(qr, c) - qr
    TQ = next((c for c in cands if 20 * _padw(c) <= qr), min(cands, key=_padw))
    qr_pad = _round_up(qr, TQ)
    n_qt = qr_pad // TQ
    if n_wb * n_qt == 1 and TQ % 256 == 0:
        TQ //= 2                                 # feed both v7x TensorCores
        n_qt = 2
    if qr_pad != qr:
        query = jnp.pad(query, ((0, qr_pad - qr), (0, 0)))

    cost = pl.CostEstimate(
        flops=int(2 * qr_pad * way_pad * d * d + 2 * WB * d * way_pad * qr_pad),
        transcendentals=0,
        bytes_accessed=int(n_wb * qr_pad * d * 2 + way_pad * d * d * 2
                           + way_pad * qr_pad * 4),
    )

    # --- kernel B: reconstruction residual + per-way distances ---
    # Grid (way_block, query_tile): the query-tile axis is innermost, so the
    # packed-G block (index (0, w)) is fetched once per way-block and stays
    # VMEM-resident; only the smaller Q stream repeats.
    dist_t = pl.pallas_call(
        _make_dist_kernel(WB, d),
        out_shape=jax.ShapeDtypeStruct((n_wb, WB, qr_pad), jnp.float32),
        grid=(n_wb, n_qt),
        in_specs=[
            pl.BlockSpec((TQ, d), lambda w, i: (i, 0)),          # query stream
            pl.BlockSpec((d, WB * d), lambda w, i: (0, w)),      # resident G
        ],
        out_specs=pl.BlockSpec((1, WB, TQ), lambda w, i: (w, 0, i)),
        compiler_params=pltpu.CompilerParams(
            dimension_semantics=("parallel", "parallel"),
            vmem_limit_bytes=48 * 1024 * 1024),
        cost_estimate=cost,
    )(query, g_packed)

    # --- tiny epilogue in plain JAX ---
    dist_t = dist_t.reshape(way_pad, qr_pad)[:way, :qr]             # (way, qr)
    mean_dist = dist_t.reshape(way, query_num, res).mean(axis=-1)   # (way, qn)
    logits = -mean_dist.T * scale[0]                                # (qn, way)
    log_pred = jax.nn.log_softmax(logits, axis=-1)
    return log_pred, support                                        # (way,sr,d)


# --------------------------- pure-JAX reference -----------------------------

def _reference_forward(feature_map_nchw, r, scale, way, shot, query_shot,
                       resnet=False):
    B, d, H, W = feature_map_nchw.shape
    res = H * W
    if resnet:
        feature_map_nchw = feature_map_nchw / np.float32(np.sqrt(640.0))
    fm = jnp.transpose(feature_map_nchw.reshape(B, d, res), (0, 2, 1))
    support = fm[: way * shot].reshape(way, shot * res, d)
    query_num = way * query_shot
    query = fm[way * shot:].reshape(1, query_num * res, d)
    alpha, beta = r[0], r[1]
    reg = support.shape[1] / support.shape[2]
    lam = reg * jnp.exp(alpha) + 1e-6
    rho = jnp.exp(beta)
    st = jnp.transpose(support, (0, 2, 1))
    sts = jnp.matmul(st, support, precision=_HI)
    m_inv = jnp.linalg.inv(sts + lam * jnp.eye(d, dtype=jnp.float32)[None])
    hat = jnp.matmul(m_inv, sts, precision=_HI)
    q_bar = jnp.matmul(query, hat, precision=_HI) * rho
    dist = jnp.sum((q_bar - query) ** 2, axis=2).T                  # (qr, way)
    neg = (-dist).reshape(-1, res, way).mean(axis=1)                # (qn, way)
    logits = neg * scale[0]
    return jax.nn.log_softmax(logits, axis=1), support


# ---------------------------------- main ------------------------------------

if __name__ == "__main__":
    H = W = 8                                     # resolution = 64 (module value)
    scale = jnp.array([1.0], dtype=jnp.float32)   # self.scale
    r = jnp.zeros((2,), dtype=jnp.float32)        # self.r = [alpha, beta]
    key = jax.random.PRNGKey(0)

    configs = [
        dict(way=2, shot=1, query_shot=2, d=64,  resnet=False),   # Conv_4 path
        dict(way=2, shot=1, query_shot=2, d=640, resnet=True),    # ResNet12 path
    ]
    for cfg in configs:
        way, shot, query_shot = cfg["way"], cfg["shot"], cfg["query_shot"]
        d, resnet = cfg["d"], cfg["resnet"]
        batch = way * shot + way * query_shot
        key, sub = jax.random.split(key)
        feature_map = jax.random.normal(sub, (batch, d, H, W), dtype=jnp.float32)

        log_pred, support = frn_forward(
            feature_map, r, scale,
            way=way, shot=shot, query_shot=query_shot, resnet=resnet)
        log_pred = jax.block_until_ready(log_pred)
        support = jax.block_until_ready(support)

        ref_logp, ref_support = _reference_forward(
            feature_map, r, scale, way, shot, query_shot, resnet=resnet)
        assert log_pred.shape == (way * query_shot, way)
        assert support.shape == (way, shot * H * W, d)
        assert np.allclose(np.asarray(support), np.asarray(ref_support),
                           atol=1e-6, rtol=1e-6), "support mismatch"
        err = float(np.abs(np.asarray(log_pred) - np.asarray(ref_logp)).max())
        # bf16 MXU inputs with f32 accumulation; diff / diff^2 / selector are
        # deliberately bf16 (per perf review), so allow a bf16-level gap.
        assert np.allclose(np.asarray(log_pred), np.asarray(ref_logp),
                           atol=3e-2, rtol=3e-2), (cfg, err)

    print("KERNEL_OK")
</pallas_src>

<mosaic_0001>
module attributes {stable_mosaic.version = 11 : i64} {
  func.func @_sts_split_kernel(%arg0: i32, %arg1: memref<1x64x64xbf16, #tpu.memory_space<vmem>>, %arg2: memref<1x64x64xbf16, #tpu.memory_space<vmem>>, %arg3: memref<1x64x64xf32, #tpu.memory_space<vmem>>) attributes {dimension_semantics = [#tpu.dimension_semantics<parallel>], iteration_bounds = array<i64: 2>, scalar_prefetch = 0 : i64, scratch_operands = 0 : i64, tpu.core_type = #tpu.core_type<tc>, window_params = [{transform_indices = @transform_0, window_bounds = array<i64: 1, 64, 64>}, {transform_indices = @transform_1, window_bounds = array<i64: 1, 64, 64>}, {transform_indices = @transform_2, window_bounds = array<i64: 1, 64, 64>}]} {
    %c0 = arith.constant 0 : index
    %c0_0 = arith.constant 0 : index
    %c0_1 = arith.constant 0 : index
    %0 = vector.load %arg1[%c0, %c0_0, %c0_1] : memref<1x64x64xbf16, #tpu.memory_space<vmem>>, vector<1x64x64xbf16>
    %1 = vector.shape_cast %0 : vector<1x64x64xbf16> to vector<64x64xbf16>
    %c0_2 = arith.constant 0 : index
    %c0_3 = arith.constant 0 : index
    %c0_4 = arith.constant 0 : index
    %2 = vector.load %arg2[%c0_2, %c0_3, %c0_4] : memref<1x64x64xbf16, #tpu.memory_space<vmem>>, vector<1x64x64xbf16>
    %3 = vector.shape_cast %2 : vector<1x64x64xbf16> to vector<64x64xbf16>
    %cst = arith.constant dense<0.000000e+00> : vector<64x64xf32>
    %4 = tpu.matmul %1, %1, %cst {dimension_numbers = #tpu.dot_dimension_numbers<[0], [0], [1], [1], [0, 1, 1, 1], [], []>} : vector<64x64xbf16>, vector<64x64xbf16>, vector<64x64xf32> -> vector<64x64xf32>
    %cst_5 = arith.constant dense<0.000000e+00> : vector<64x64xf32>
    %5 = tpu.matmul %1, %3, %cst_5 {dimension_numbers = #tpu.dot_dimension_numbers<[0], [0], [1], [1], [0, 1, 1, 1], [], []>} : vector<64x64xbf16>, vector<64x64xbf16>, vector<64x64xf32> -> vector<64x64xf32>
    %cst_6 = arith.constant dense<0.000000e+00> : vector<64x64xf32>
    %6 = tpu.matmul %3, %1, %cst_6 {dimension_numbers = #tpu.dot_dimension_numbers<[0], [0], [1], [1], [0, 1, 1, 1], [], []>} : vector<64x64xbf16>, vector<64x64xbf16>, vector<64x64xf32> -> vector<64x64xf32>
    %7 = arith.addf %5, %6 : vector<64x64xf32>
    %8 = arith.addf %4, %7 : vector<64x64xf32>
    %c0_7 = arith.constant 0 : index
    %c0_8 = arith.constant 0 : index
    %c0_9 = arith.constant 0 : index
    %9 = vector.load %arg3[%c0_7, %c0_8, %c0_9] : memref<1x64x64xf32, #tpu.memory_space<vmem>>, vector<1x64x64xf32>
    %10 = vector.shape_cast %9 : vector<1x64x64xf32> to vector<64x64xf32>
    %11 = vector.shape_cast %8 : vector<64x64xf32> to vector<1x64x64xf32>
    tpu.vector_store %arg3[%c0_7, %c0_8, %c0_9], %11 {strides = array<i32>} : memref<1x64x64xf32, #tpu.memory_space<vmem>>, vector<1x64x64xf32>,
    return
  }
  func.func @transform_0(%arg0: i32) -> (i32, i32, i32) {
    %c0_i32 = arith.constant 0 : i32
    %c0_i32_0 = arith.constant 0 : i32
    %c0_i32_1 = arith.constant 0 : i32
    return %arg0, %c0_i32, %c0_i32_0 : i32, i32, i32
  }
  func.func @transform_1(%arg0: i32) -> (i32, i32, i32) {
    %c0_i32 = arith.constant 0 : i32
    %c0_i32_0 = arith.constant 0 : i32
    %c0_i32_1 = arith.constant 0 : i32
    return %arg0, %c0_i32, %c0_i32_0 : i32, i32, i32
  }
  func.func @transform_2(%arg0: i32) -> (i32, i32, i32) {
    %c0_i32 = arith.constant 0 : i32
    %c0_i32_0 = arith.constant 0 : i32
    %c0_i32_1 = arith.constant 0 : i32
    return %arg0, %c0_i32, %c0_i32_0 : i32, i32, i32
  }
}

</mosaic_0001>

<llo_original>
// kernel: tpu_custom_call.1
$region0: #{tpu_custom_call.1}
  #allocation0 [shape = 'u32[]', space=smem, size = 0x4, offset = 0x4, fixed_abs, tag = 'smem constant byte address 0x4 - core index']
  #allocation1 [shape = 'u32[144,128]{1,0:T(1,128)}', space=vmem, size = 0x12000, scoped, tag = 'internal scratch']
  %s0 = inlined_call_operand.hbm [shape: bf16[2,64,64], index: 0, kind: input, shape index: {}]
  %s1 = inlined_call_operand.hbm [shape: bf16[2,64,64], index: 1, kind: input, shape index: {}]
  %s2 = inlined_call_operand.hbm [shape: f32[2,64,64], index: 2, kind: output, shape index: {}]
  %s3 = sld [smem:[#allocation0]]
  $region49: #{tpu_custom_call.1} parent=0
    _
  %s5 = ssub.s32 1, %s3
  %s6 = scalar_select 0, %s5, %s3
  $region1: #{tpu_custom_call.1} parent=0
    #allocation2 [shape = 'u8[32768]{0}', space=vmem, size = 0x8000, scoped, tag = 'input window, operand 0']
    #allocation3 [shape = 's32[2]{0}', space=sflag, size = 0x8, scoped, tag = 'scoped memory for tpu_custom_call.1']
    #allocation4 [shape = 's32[2]{0}', space=sflag, size = 0x8, scoped, tag = 'scoped memory for tpu_custom_call.1']
    #allocation5 [shape = 'u8[32768]{0}', space=vmem, size = 0x8000, scoped, tag = 'input window, operand 1']
    #allocation6 [shape = 's32[2]{0}', space=sflag, size = 0x8, scoped, tag = 'scoped memory for tpu_custom_call.1']
    #allocation7 [shape = 'u8[65536]{0}', space=vmem, size = 0x10000, scoped, tag = 'output window, operand 0']
    %7 = vsyncpa [#allocation3], 0
    %s8 = scalar_lea.sflag [#allocation3], 1
    %9 = vsyncpa %s8, 0
    %10 = vsyncpa [#allocation6], 0
    %s11 = scalar_lea.sflag [#allocation6], 1
    %12 = vsyncpa %s11, 0
    %13 = vsyncpa [#allocation4], 0
    %s14 = scalar_lea.sflag [#allocation4], 1
    %15 = vsyncpa %s14, 0
    loop: start=0, step=1, limit=4
    $region2: #{tpu_custom_call.1} parent=1 // loop_pre_header
      _
    $region3: #{tpu_custom_call.1} parent=1 // loop_header
      %s17 = sphi 0, %s21
      %p18 = scmp.ge.s32.totalorder %s17, 4
      %s27 = sphi 0, %s29
      %s30 = sphi 0, %s27
      %s31 = sphi 0, %s30
      %s47 = sphi 0, %s31
      %s53 = sphi 0, %s55
      %s56 = sphi 0, %s53
      %s57 = sphi 0, %s56
      %s73 = sphi 0, %s57
      %s79 = sphi 0, %s81
      %s82 = sphi 0, %s79
      %s83 = sphi 0, %s82
      %s99 = sphi 0, %s83
    $region4: #{tpu_custom_call.1} parent=1 // loop_header_branch
      %20 = sbr.rel (%p18) target = $region8
    $region5: #{tpu_custom_call.1} parent=1 // loop_body
      %s22 = ssub.s32 %s17, 1
      %s23 = ssub.s32 %s17, 2
      %s24 = sadd.s32 %s17, 1
      %s25 = ssub.s32 %s17, %s24
      %p26 = scmp.eq.s32.totalorder %s25, 0
      %s28 = sadd.s32 %s27, 1
      %s29 = scalar_select %p26, %s27, %s28
      %p32 = pneg %p26
      %p33 = scmp.eq.s32.totalorder %s17, 1
      %p34 = por %p32, %p33
      %p35 = scmp.ne.s32.totalorder %s27, %s30
      %p36 = scmp.eq.s32.totalorder %s17, 0
      %p37 = por %p35, %p36
      %p38 = scmp.ne.s32.totalorder %s27, %s30
      %p39 = scmp.eq.s32.totalorder %s22, 1
      %p40 = por %p38, %p39
      %p41 = scmp.ne.s32.totalorder %s30, %s31
      %p42 = scmp.eq.s32.totalorder %s22, 0
      %p43 = por %p41, %p42
      %p44 = scmp.ne.s32.totalorder %s30, %s31
      %p45 = scmp.eq.s32.totalorder %s23, 1
      %p46 = por %p44, %p45
      %p48 = scmp.ne.s32.totalorder %s31, %s47
      %p49 = scmp.eq.s32.totalorder %s23, 0
      %p50 = por %p48, %p49
      %s51 = ssub.s32 %s17, %s24
      %p52 = scmp.eq.s32.totalorder %s51, 0
      %s54 = sadd.s32 %s53, 1
      %s55 = scalar_select %p52, %s53, %s54
      %p58 = pneg %p52
      %p59 = scmp.eq.s32.totalorder %s17, 1
      %p60 = por %p58, %p59
      %p61 = scmp.ne.s32.totalorder %s53, %s56
      %p62 = scmp.eq.s32.totalorder %s17, 0
      %p63 = por %p61, %p62
      %p64 = scmp.ne.s32.totalorder %s53, %s56
      %p65 = scmp.eq.s32.totalorder %s22, 1
      %p66 = por %p64, %p65
      %p67 = scmp.ne.s32.totalorder %s56, %s57
      %p68 = scmp.eq.s32.totalorder %s22, 0
      %p69 = por %p67, %p68
      %p70 = scmp.ne.s32.totalorder %s56, %s57
      %p71 = scmp.eq.s32.totalorder %s23, 1
      %p72 = por %p70, %p71
      %p74 = scmp.ne.s32.totalorder %s57, %s73
      %p75 = scmp.eq.s32.totalorder %s23, 0
      %p76 = por %p74, %p75
      %s77 = ssub.s32 %s17, %s24
      %p78 = scmp.eq.s32.totalorder %s77, 0
      %s80 = sadd.s32 %s79, 1
      %s81 = scalar_select %p78, %s79, %s80
      %p84 = pneg %p78
      %p85 = scmp.eq.s32.totalorder %s17, 1
      %p86 = por %p84, %p85
      %p87 = scmp.ne.s32.totalorder %s79, %s82
      %p88 = scmp.eq.s32.totalorder %s17, 0
      %p89 = por %p87, %p88
      %p90 = scmp.ne.s32.totalorder %s79, %s82
      %p91 = scmp.eq.s32.totalorder %s22, 1
      %p92 = por %p90, %p91
      %p93 = scmp.ne.s32.totalorder %s82, %s83
      %p94 = scmp.eq.s32.totalorder %s22, 0
      %p95 = por %p93, %p94
      %p96 = scmp.ne.s32.totalorder %s82, %s83
      %p97 = scmp.eq.s32.totalorder %s23, 1
      %p98 = por %p96, %p97
      %p100 = scmp.ne.s32.totalorder %s83, %s99
      %p101 = scmp.eq.s32.totalorder %s23, 0
      %p102 = por %p100, %p101
      %p103 = scmp.le.s32.totalorder 1, %s17
      %p104 = scmp.lt.s32.totalorder %s17, 3
      %p105 = pnand %p103, %p104
      %p106 = pneg %p105
      // Predicated region
      $region9: #{tpu_custom_call.1} parent=5 // pred_check
        _
      $region10: #{tpu_custom_call.1} parent=5 // pred_check_branch
        %108 = sbr.rel (%p105) target = $region12
      $region11: #{tpu_custom_call.1} parent=5 // pred_region
        %s109 = ssub.s32 %s17, 1
      $region12: #{tpu_custom_call.1} parent=5 // pred_fallthru
        _
      %p110 = scmp.lt.s32.totalorder %s17, 2
      // Predicated region
      $region13: #{tpu_custom_call.1} parent=5 // pred_check
        %p111 = pneg %p110
      $region14: #{tpu_custom_call.1} parent=5 // pred_check_branch
        %113 = sbr.rel (%p111) target = $region16
      $region15: #{tpu_custom_call.1} parent=5 // pred_region
        // Predicated region
        $region17: #{tpu_custom_call.1} parent=15 // pred_check
          %p114 = pneg %p37
        $region18: #{tpu_custom_call.1} parent=15 // pred_check_branch
          %116 = sbr.rel (%p114) target = $region20
        $region19: #{tpu_custom_call.1} parent=15 // pred_region
          %s117 = sand.u32 %s27, 1
          %s118 = scalar_lea.sflag [#allocation3], %s117
          %s119 = sand.u32 %s27, 1
          %s120 = smul.addr %s119, 32
          %s121 = scalar_lea.vmem [#allocation2], %s120
          %s123 = ssub.s32 512, 512
          %124 = vsyncadd %s118, %s123
          %s125 = smul.addr %s17, 8
          %s126 = smul.addr %s125, 64
          %s127 = scalar_lea.hbm %s0, %s126
          %s128 = sshll.u32 %s121, 4
          %s129 = int_to_ptr.vmem [resolvable:$true] %s128
          %134 = dma.hbm_to_vmem [thread:$0]  %s127, 512, %s129, %s118, 64, 64, 4
        $region20: #{tpu_custom_call.1} parent=15 // pred_fallthru
          _
        // Predicated region
        $region21: #{tpu_custom_call.1} parent=15 // pred_check
          %p135 = pneg %p63
        $region22: #{tpu_custom_call.1} parent=15 // pred_check_branch
          %137 = sbr.rel (%p135) target = $region24
        $region23: #{tpu_custom_call.1} parent=15 // pred_region
          %s138 = sand.u32 %s53, 1
          %s139 = scalar_lea.sflag [#allocation6], %s138
          %s140 = sand.u32 %s53, 1
          %s141 = smul.addr %s140, 32
          %s142 = scalar_lea.vmem [#allocation5], %s141
          %s144 = ssub.s32 512, 512
          %145 = vsyncadd %s139, %s144
          %s146 = smul.addr %s17, 8
          %s147 = smul.addr %s146, 64
          %s148 = scalar_lea.hbm %s1, %s147
          %s149 = sshll.u32 %s142, 4
          %s150 = int_to_ptr.vmem [resolvable:$true] %s149
          %155 = dma.hbm_to_vmem [thread:$0]  %s148, 512, %s150, %s139, 64, 64, 4
        $region24: #{tpu_custom_call.1} parent=15 // pred_fallthru
          _
      $region16: #{tpu_custom_call.1} parent=5 // pred_fallthru
        _
      %p156 = scmp.le.s32.totalorder 1, %s17
      %p157 = scmp.lt.s32.totalorder %s17, 3
      %p158 = pnand %p156, %p157
      %p159 = pneg %p158
      // Predicated region
      $region25: #{tpu_custom_call.1} parent=5 // pred_check
        _
      $region26: #{tpu_custom_call.1} parent=5 // pred_check_branch
        %161 = sbr.rel (%p158) target = $region28
      $region27: #{tpu_custom_call.1} parent=5 // pred_region
        %s162 = ssub.s32 %s17, 1
        %s163 = sand.u32 %s30, 1
        %s164 = scalar_lea.sflag [#allocation3], %s163
        %s165 = sand.u32 %s30, 1
        %s166 = smul.addr %s165, 32
        %s167 = scalar_lea.vmem [#allocation2], %s166
        // Predicated region
        $region29: #{tpu_custom_call.1} parent=27 // pred_check
          %p168 = pneg %p43
        $region30: #{tpu_custom_call.1} parent=27 // pred_check_branch
          %170 = sbr.rel (%p168) target = $region32
        $region31: #{tpu_custom_call.1} parent=27 // pred_region
          %171 = dma.done %s164, 512
        $region32: #{tpu_custom_call.1} parent=27 // pred_fallthru
          _
        %s172 = sand.u32 %s56, 1
        %s173 = scalar_lea.sflag [#allocation6], %s172
        %s174 = sand.u32 %s56, 1
        %s175 = smul.addr %s174, 32
        %s176 = scalar_lea.vmem [#allocation5], %s175
        // Predicated region
        $region33: #{tpu_custom_call.1} parent=27 // pred_check
          %p177 = pneg %p69
        $region34: #{tpu_custom_call.1} parent=27 // pred_check_branch
          %179 = sbr.rel (%p177) target = $region36
        $region35: #{tpu_custom_call.1} parent=27 // pred_region
          %180 = dma.done %s173, 512
        $region36: #{tpu_custom_call.1} parent=27 // pred_fallthru
          _
        %s181 = sand.u32 %s30, 1
        %s182 = scalar_lea.sflag [#allocation3], %s181
        %s183 = sand.u32 %s30, 1
        %s184 = smul.addr %s183, 32
        %s185 = scalar_lea.vmem [#allocation2], %s184
        %p186 = pneg %p43
        %p187 = pneg %p40
        %s188 = sand.u32 %s56, 1
        %s189 = scalar_lea.sflag [#allocation6], %s188
        %s190 = sand.u32 %s56, 1
        %s191 = smul.addr %s190, 32
        %s192 = scalar_lea.vmem [#allocation5], %s191
        %p193 = pneg %p69
        %p194 = pneg %p66
        %p195 = pneg %p95
        %p196 = pneg %p92
        %s197 = sand.u32 %s82, 1
        %s198 = scalar_lea.sflag [#allocation4], %s197
        %s199 = sand.u32 %s82, 1
        %s200 = smul.addr %s199, 64
        %s201 = scalar_lea.vmem [#allocation7], %s200
        %v203 = vld [vmem:[%s167] sm:$0xf]
        %v204 = vld [vmem:[%s167 + $0x4] sm:$0xf]
        %v205 = vld [vmem:[%s167 + $0x8] sm:$0xf]
        %v206 = vld [vmem:[%s167 + $0xc] sm:$0xf]
        %v207 = vld [vmem:[%s167 + $0x10] sm:$0xf]
        %v208 = vld [vmem:[%s167 + $0x14] sm:$0xf]
        %v209 = vld [vmem:[%s167 + $0x18] sm:$0xf]
        %v210 = vld [vmem:[%s167 + $0x1c] sm:$0xf]
        %v211 = vld [vmem:[%s176] sm:$0xf]
        %v212 = vld [vmem:[%s176 + $0x4] sm:$0xf]
        %v213 = vld [vmem:[%s176 + $0x8] sm:$0xf]
        %v214 = vld [vmem:[%s176 + $0xc] sm:$0xf]
        %v215 = vld [vmem:[%s176 + $0x10] sm:$0xf]
        %v216 = vld [vmem:[%s176 + $0x14] sm:$0xf]
        %v217 = vld [vmem:[%s176 + $0x18] sm:$0xf]
        %v218 = vld [vmem:[%s176 + $0x1c] sm:$0xf]
        %v227 = vunpack.c.l.b16 %v211
        %v228 = vunpack.c.l.b16 %v212
        %v229 = vunpack.c.l.b16 %v213
        %v230 = vunpack.c.l.b16 %v214
        %v231 = vunpack.c.l.b16 %v215
        %v232 = vunpack.c.l.b16 %v216
        %v233 = vunpack.c.l.b16 %v217
        %v234 = vunpack.c.l.b16 %v218
        %v235 = vpack.c.b16 %v228, %v227
        %v236 = vpack.c.b16 %v230, %v229
        %v237 = vpack.c.b16 %v232, %v231
        %v238 = vpack.c.b16 %v234, %v233
        %243 = vxpose.xlu0.c.b16.start [1/8] %v235, 128
        %244 = vxpose.xlu0.c.b16.cont [2/8] %v236, 128
        %245 = vxpose.xlu0.c.b16.cont [3/8] %v237, 128
        %246 = vxpose.xlu0.c.b16.cont [4/8] %v238, 128
        %247 = vxpose.xlu0.c.b16.cont [5/8] 0, 128
        %248 = vxpose.xlu0.c.b16.cont [6/8] 0, 128
        %249 = vxpose.xlu0.c.b16.cont [7/8] 0, 128
        %250 = vxpose.xlu0.c.b16.end [8/8] 0, 128
        %v251 = vpop.trf.xlu0
        %v252 = vpop.trf.xlu0
        %v253 = vpop.trf.xlu0
        %v254 = vpop.trf.xlu0
        %v255 = vpop.trf.xlu0
        %v256 = vpop.trf.xlu0
        %v257 = vpop.trf.xlu0
        %v258 = vpop.trf.xlu0
        %v267 = vunpack.c.l.b16 %v203
        %v268 = vunpack.c.l.b16 %v204
        %v269 = vunpack.c.l.b16 %v205
        %v270 = vunpack.c.l.b16 %v206
        %v271 = vunpack.c.l.b16 %v207
        %v272 = vunpack.c.l.b16 %v208
        %v273 = vunpack.c.l.b16 %v209
        %v274 = vunpack.c.l.b16 %v210
        %v275 = vpack.c.b16 %v268, %v267
        %v276 = vpack.c.b16 %v270, %v269
        %v277 = vpack.c.b16 %v272, %v271
        %v278 = vpack.c.b16 %v274, %v273
        %vm283 = vcmask 523264
        %v285 = vsel %vm283, %v251, 0
        %v288 = vsel %vm283, %v252, 0
        %v291 = vsel %vm283, %v253, 0
        %v294 = vsel %vm283, %v254, 0
        %296 = vmatprep.subr.bf16.mxu0 0
        %297 = vmatpush1.bf16.msra.mxu0 0
        %298 = vmatprep.subr.bf16.mxu0 0
        %299 = vmatpush1.bf16.msra.mxu0 0
        %300 = vmatprep.subr.bf16.mxu0 0
        %301 = vmatpush1.bf16.msra.mxu0 0
        %302 = vmatprep.subr.bf16.mxu0 0
        %303 = vmatpush1.bf16.msra.mxu0 0
        %304 = vmatprep.subr.bf16.mxu0 0
        %305 = vmatpush1.bf16.msra.mxu0 %v278
        %306 = vmatprep.subr.bf16.mxu0 0
        %307 = vmatpush1.bf16.msra.mxu0 %v277
        %308 = vmatprep.subr.bf16.mxu0 0
        %309 = vmatpush1.bf16.msra.mxu0 %v276
        %310 = vmatprep.subr.bf16.mxu0 0
        %311 = vmatpush1.bf16.msra.mxu0 %v275
        %312 = vmatprep.subr.bf16.mxu0 0
        %313 = vmatpush2.bf16.msra.mxu0 0
        %314 = vmatprep.subr.bf16.mxu0 0
        %315 = vmatpush2.bf16.msra.mxu0 0
        %316 = vmatprep.subr.bf16.mxu0 0
        %317 = vmatpush2.bf16.msra.mxu0 0
        %318 = vmatprep.subr.bf16.mxu0 0
        %319 = vmatpush2.bf16.msra.mxu0 0
        %320 = vmatprep.subr.bf16.mxu0 0
        %321 = vmatpush2.bf16.msra.mxu0 0
        %322 = vmatprep.subr.bf16.mxu0 0
        %323 = vmatpush2.bf16.msra.mxu0 0
        %324 = vmatprep.subr.bf16.mxu0 0
        %325 = vmatpush2.bf16.msra.mxu0 0
        %326 = vmatprep.subr.bf16.mxu0 0
        %327 = vmatpush2.bf16.msra.mxu0 0
        %328 = vmatprep.mubr.bf16.mxu0 0
        %329 = vmatmul.mubr.bf16.gmra.mxu0 %v285
        %v330 = vpop.f32.mrf.mxu0
        %v331 = vadd.f32 0.0, %v330
        %v332 = vpop.f32.mrf.mxu0
        %v333 = vpop.f32.mrf.mxu0
        %v334 = vadd.f32 0.0, %v333
        %v335 = vpop.f32.mrf.mxu0
        %336 = vmatprep.mubr.bf16.mxu0 0
        %337 = vmatmul.mubr.bf16.gmra.mxu0 %v288
        %v338 = vpop.f32.mrf.mxu0
        %v339 = vadd.f32 0.0, %v338
        %v340 = vpop.f32.mrf.mxu0
        %v341 = vpop.f32.mrf.mxu0
        %v342 = vadd.f32 0.0, %v341
        %v343 = vpop.f32.mrf.mxu0
        %344 = vmatprep.mubr.bf16.mxu0 0
        %345 = vmatmul.mubr.bf16.gmra.mxu0 %v291
        %v346 = vpop.f32.mrf.mxu0
        %v347 = vadd.f32 0.0, %v346
        %v348 = vpop.f32.mrf.mxu0
        %v349 = vpop.f32.mrf.mxu0
        %v350 = vadd.f32 0.0, %v349
        %v351 = vpop.f32.mrf.mxu0
        %352 = vmatprep.mubr.bf16.mxu0 0
        %353 = vmatmul.mubr.bf16.gmra.mxu0 %v294
        %v354 = vpop.f32.mrf.mxu0
        %v355 = vadd.f32 0.0, %v354
        %v356 = vpop.f32.mrf.mxu0
        %v357 = vpop.f32.mrf.mxu0
        %v358 = vadd.f32 0.0, %v357
        %v359 = vpop.f32.mrf.mxu0
        %360 = vdwg.mxu0
        %361 = vxpose.xlu0.c.b16.start [1/8] %v275, 128
        %362 = vxpose.xlu0.c.b16.cont [2/8] %v276, 128
        %363 = vxpose.xlu0.c.b16.cont [3/8] %v277, 128
        %364 = vxpose.xlu0.c.b16.cont [4/8] %v278, 128
        %365 = vxpose.xlu0.c.b16.cont [5/8] 0, 128
        %366 = vxpose.xlu0.c.b16.cont [6/8] 0, 128
        %367 = vxpose.xlu0.c.b16.cont [7/8] 0, 128
        %368 = vxpose.xlu0.c.b16.end [8/8] 0, 128
        %v369 = vpop.trf.xlu0
        %v370 = vpop.trf.xlu0
        %v371 = vpop.trf.xlu0
        %v372 = vpop.trf.xlu0
        %v373 = vpop.trf.xlu0
        %v374 = vpop.trf.xlu0
        %v375 = vpop.trf.xlu0
        %v376 = vpop.trf.xlu0
        %v378 = vsel %vm283, %v369, 0
        %v381 = vsel %vm283, %v370, 0
        %v384 = vsel %vm283, %v371, 0
        %v387 = vsel %vm283, %v372, 0
        %389 = vmatprep.subr.bf16.mxu0 0
        %390 = vmatpush1.bf16.msra.mxu0 0
        %391 = vmatprep.subr.bf16.mxu0 0
        %392 = vmatpush1.bf16.msra.mxu0 0
        %393 = vmatprep.subr.bf16.mxu0 0
        %394 = vmatpush1.bf16.msra.mxu0 0
        %395 = vmatprep.subr.bf16.mxu0 0
        %396 = vmatpush1.bf16.msra.mxu0 0
        %397 = vmatprep.subr.bf16.mxu0 0
        %398 = vmatpush1.bf16.msra.mxu0 %v238
        %399 = vmatprep.subr.bf16.mxu0 0
        %400 = vmatpush1.bf16.msra.mxu0 %v237
        %401 = vmatprep.subr.bf16.mxu0 0
        %402 = vmatpush1.bf16.msra.mxu0 %v236
        %403 = vmatprep.subr.bf16.mxu0 0
        %404 = vmatpush1.bf16.msra.mxu0 %v235
        %405 = vmatprep.subr.bf16.mxu0 0
        %406 = vmatpush2.bf16.msra.mxu0 0
        %407 = vmatprep.subr.bf16.mxu0 0
        %408 = vmatpush2.bf16.msra.mxu0 0
        %409 = vmatprep.subr.bf16.mxu0 0
        %410 = vmatpush2.bf16.msra.mxu0 0
        %411 = vmatprep.subr.bf16.mxu0 0
        %412 = vmatpush2.bf16.msra.mxu0 0
        %413 = vmatprep.subr.bf16.mxu0 0
        %414 = vmatpush2.bf16.msra.mxu0 0
        %415 = vmatprep.subr.bf16.mxu0 0
        %416 = vmatpush2.bf16.msra.mxu0 0
        %417 = vmatprep.subr.bf16.mxu0 0
        %418 = vmatpush2.bf16.msra.mxu0 0
        %419 = vmatprep.subr.bf16.mxu0 0
        %420 = vmatpush2.bf16.msra.mxu0 0
        %421 = vmatprep.mubr.bf16.mxu0 0
        %422 = vmatmul.mubr.bf16.gmra.mxu0 %v378
        %v423 = vpop.f32.mrf.mxu0
        %v424 = vadd.f32 %v331, %v423
        %v425 = vpop.f32.mrf.mxu0
        %v426 = vpop.f32.mrf.mxu0
        %v427 = vadd.f32 %v334, %v426
        %v428 = vpop.f32.mrf.mxu0
        %429 = vmatprep.mubr.bf16.mxu0 0
        %430 = vmatmul.mubr.bf16.gmra.mxu0 %v381
        %v431 = vpop.f32.mrf.mxu0
        %v432 = vadd.f32 %v339, %v431
        %v433 = vpop.f32.mrf.mxu0
        %v434 = vpop.f32.mrf.mxu0
        %v435 = vadd.f32 %v342, %v434
        %v436 = vpop.f32.mrf.mxu0
        %437 = vmatprep.mubr.bf16.mxu0 0
        %438 = vmatmul.mubr.bf16.gmra.mxu0 %v384
        %v439 = vpop.f32.mrf.mxu0
        %v440 = vadd.f32 %v347, %v439
        %v441 = vpop.f32.mrf.mxu0
        %v442 = vpop.f32.mrf.mxu0
        %v443 = vadd.f32 %v350, %v442
        %v444 = vpop.f32.mrf.mxu0
        %445 = vmatprep.mubr.bf16.mxu0 0
        %446 = vmatmul.mubr.bf16.gmra.mxu0 %v387
        %v447 = vpop.f32.mrf.mxu0
        %v448 = vadd.f32 %v355, %v447
        %v449 = vpop.f32.mrf.mxu0
        %v450 = vpop.f32.mrf.mxu0
        %v451 = vadd.f32 %v358, %v450
        %v452 = vpop.f32.mrf.mxu0
        %453 = vdwg.mxu0
        %454 = vmatprep.subr.bf16.mxu0 0
        %455 = vmatpush1.bf16.msra.mxu0 0
        %456 = vmatprep.subr.bf16.mxu0 0
        %457 = vmatpush1.bf16.msra.mxu0 0
        %458 = vmatprep.subr.bf16.mxu0 0
        %459 = vmatpush1.bf16.msra.mxu0 0
        %460 = vmatprep.subr.bf16.mxu0 0
        %461 = vmatpush1.bf16.msra.mxu0 0
        %462 = vmatprep.subr.bf16.mxu0 0
        %463 = vmatpush1.bf16.msra.mxu0 %v278
        %464 = vmatprep.subr.bf16.mxu0 0
        %465 = vmatpush1.bf16.msra.mxu0 %v277
        %466 = vmatprep.subr.bf16.mxu0 0
        %467 = vmatpush1.bf16.msra.mxu0 %v276
        %468 = vmatprep.subr.bf16.mxu0 0
        %469 = vmatpush1.bf16.msra.mxu0 %v275
        %470 = vmatprep.subr.bf16.mxu0 0
        %471 = vmatpush2.bf16.msra.mxu0 0
        %472 = vmatprep.subr.bf16.mxu0 0
        %473 = vmatpush2.bf16.msra.mxu0 0
        %474 = vmatprep.subr.bf16.mxu0 0
        %475 = vmatpush2.bf16.msra.mxu0 0
        %476 = vmatprep.subr.bf16.mxu0 0
        %477 = vmatpush2.bf16.msra.mxu0 0
        %478 = vmatprep.subr.bf16.mxu0 0
        %479 = vmatpush2.bf16.msra.mxu0 0
        %480 = vmatprep.subr.bf16.mxu0 0
        %481 = vmatpush2.bf16.msra.mxu0 0
        %482 = vmatprep.subr.bf16.mxu0 0
        %483 = vmatpush2.bf16.msra.mxu0 0
        %484 = vmatprep.subr.bf16.mxu0 0
        %485 = vmatpush2.bf16.msra.mxu0 0
        %486 = vmatprep.mubr.bf16.mxu0 0
        %487 = vmatmul.mubr.bf16.gmra.mxu0 %v378
        %v488 = vpop.f32.mrf.mxu0
        %v489 = vadd.f32 %v424, %v488
        %v490 = vpop.f32.mrf.mxu0
        %v491 = vpop.f32.mrf.mxu0
        %v492 = vadd.f32 %v427, %v491
        %v493 = vpop.f32.mrf.mxu0
        %494 = vmatprep.mubr.bf16.mxu0 0
        %495 = vmatmul.mubr.bf16.gmra.mxu0 %v381
        %v496 = vpop.f32.mrf.mxu0
        %v497 = vadd.f32 %v432, %v496
        %v498 = vpop.f32.mrf.mxu0
        %v499 = vpop.f32.mrf.mxu0
        %v500 = vadd.f32 %v435, %v499
        %v501 = vpop.f32.mrf.mxu0
        %502 = vmatprep.mubr.bf16.mxu0 0
        %503 = vmatmul.mubr.bf16.gmra.mxu0 %v384
        %v504 = vpop.f32.mrf.mxu0
        %v505 = vadd.f32 %v440, %v504
        %v506 = vpop.f32.mrf.mxu0
        %v507 = vpop.f32.mrf.mxu0
        %v508 = vadd.f32 %v443, %v507
        %v509 = vpop.f32.mrf.mxu0
        %510 = vmatprep.mubr.bf16.mxu0 0
        %511 = vmatmul.mubr.bf16.gmra.mxu0 %v387
        %v512 = vpop.f32.mrf.mxu0
        %v513 = vadd.f32 %v448, %v512
        %v514 = vpop.f32.mrf.mxu0
        %v515 = vpop.f32.mrf.mxu0
        %v516 = vadd.f32 %v451, %v515
        %v517 = vpop.f32.mrf.mxu0
        %518 = vdwg.mxu0
        %519 = vst.msk [vmem:[%s201] sm:$0xff] %vm283, %v489
        %520 = vst.msk [vmem:[%s201 + $0x8] sm:$0xff] %vm283, %v492
        %521 = vst.msk [vmem:[%s201 + $0x10] sm:$0xff] %vm283, %v497
        %522 = vst.msk [vmem:[%s201 + $0x18] sm:$0xff] %vm283, %v500
        %523 = vst.msk [vmem:[%s201 + $0x20] sm:$0xff] %vm283, %v505
        %524 = vst.msk [vmem:[%s201 + $0x28] sm:$0xff] %vm283, %v508
        %525 = vst.msk [vmem:[%s201 + $0x30] sm:$0xff] %vm283, %v513
        %526 = vst.msk [vmem:[%s201 + $0x38] sm:$0xff] %vm283, %v516
        %s527 = sand.u32 %s82, 1
        %s528 = scalar_lea.sflag [#allocation4], %s527
        %s529 = sand.u32 %s82, 1
        %s530 = smul.addr %s529, 64
        %s531 = scalar_lea.vmem [#allocation7], %s530
        // Predicated region
        $region37: #{tpu_custom_call.1} parent=27 // pred_check
          %p532 = pneg %p92
        $region38: #{tpu_custom_call.1} parent=27 // pred_check_branch
          %534 = sbr.rel (%p532) target = $region40
        $region39: #{tpu_custom_call.1} parent=27 // pred_region
          %s536 = ssub.s32 1024, 1024
          %537 = vsyncadd %s528, %s536
          %s538 = smul.addr %s22, 8
          %s539 = smul.addr %s538, 128
          %s540 = scalar_lea.hbm %s2, %s539
          %s541 = sshll.u32 %s531, 4
          %s542 = int_to_ptr.vmem [resolvable:$true] %s541
          %547 = dma.vmem_to_hbm [thread:$0]  %s542, 1024, %s540, %s528, 128, 128, 8
        $region40: #{tpu_custom_call.1} parent=27 // pred_fallthru
          _
      $region28: #{tpu_custom_call.1} parent=5 // pred_fallthru
        _
      %p548 = scmp.le.s32.totalorder 2, %s17
      // Predicated region
      $region41: #{tpu_custom_call.1} parent=5 // pred_check
        %p549 = pneg %p548
      $region42: #{tpu_custom_call.1} parent=5 // pred_check_branch
        %551 = sbr.rel (%p549) target = $region44
      $region43: #{tpu_custom_call.1} parent=5 // pred_region
        %s552 = ssub.s32 %s17, 2
        // Predicated region
        $region45: #{tpu_custom_call.1} parent=43 // pred_check
          %p553 = pneg %p98
        $region46: #{tpu_custom_call.1} parent=43 // pred_check_branch
          %555 = sbr.rel (%p553) target = $region48
        $region47: #{tpu_custom_call.1} parent=43 // pred_region
          %s556 = sand.u32 %s83, 1
          %s557 = scalar_lea.sflag [#allocation4], %s556
          %s558 = sand.u32 %s83, 1
          %s559 = smul.addr %s558, 64
          %s560 = scalar_lea.vmem [#allocation7], %s559
          %561 = dma.done %s557, 1024
        $region48: #{tpu_custom_call.1} parent=43 // pred_fallthru
          _
      $region44: #{tpu_custom_call.1} parent=5 // pred_fallthru
        _
    $region6: #{tpu_custom_call.1} parent=1 // loop_footer
      %s21 = sadd.s32 1, %s17
    $region7: #{tpu_custom_call.1} parent=1 // loop_footer_branch
      %16 = sbr.rel target = $region3
    $region8: #{tpu_custom_call.1} parent=1 // loop_exit
      _
    %562 = vsyncpa [#allocation3], 1
    %s563 = scalar_lea.sflag [#allocation3], 1
    %564 = vsyncpa %s563, 1
    %565 = vsyncpa [#allocation6], 1
    %s566 = scalar_lea.sflag [#allocation6], 1
    %567 = vsyncpa %s566, 1
    %568 = vsyncpa [#allocation4], 1
    %s569 = scalar_lea.sflag [#allocation4], 1
    %570 = vsyncpa %s569, 1

</llo_original>
